<compile_context>
chip_gen: v7x
topology: tpu7x:2x2x1
jax: 0.10.0
libtpu: 0.0.40
codegen_flags: <defaults>
</compile_context>

<pallas_src>
import functools
import math

import jax
import jax.numpy as jnp
from jax import lax
from jax.experimental import pallas as pl
from jax.experimental.pallas import tpu as pltpu


def _round_up(v, m):
    return ((v + m - 1) // m) * m


def _p4_conv_relu_kernel(x_ref, w_ref, b_ref, o_ref, *, K, TH, W_out, stride):
    """One (batch, row-tile) grid step.

    x_ref : (Hp_pad, Wp, C_in)        whole padded image (bf16), VMEM-resident per batch
    w_ref : (K*K*C_in, C_out_pad)     flattened HWIO weights (bf16)
    b_ref : (1, C_out_pad)            bias (f32)
    o_ref : (TH*W_out, C_out_pad)     row-tile of the output (f32)
    """
    C_in = x_ref.shape[-1]
    Wp = x_ref.shape[-2]
    t = pl.program_id(1)
    rows_in = (TH - 1) * stride + K                       # input rows feeding this tile
    row0 = pl.multiple_of(t * (TH * stride), TH * stride)
    x = x_ref[pl.ds(row0, rows_in), :, :]                 # (rows_in, Wp, C_in) bf16

    taps = []
    if stride == 1:
        for kh in range(K):
            for kw in range(K):
                taps.append(x[kh:kh + TH, kw:kw + W_out, :])
    else:
        # One strided subsample per (row-phase, col-phase): stride**2 strided
        # slices total instead of K*K, keeping the stride>1 path off the XLU.
        phase = {}
        for pr in {kh % stride for kh in range(K)}:
            for pc in {kw % stride for kw in range(K)}:
                nr = (rows_in - pr + stride - 1) // stride
                nc = (Wp - pc + stride - 1) // stride
                phase[(pr, pc)] = lax.slice(
                    x, (pr, pc, 0),
                    (pr + (nr - 1) * stride + 1, pc + (nc - 1) * stride + 1, C_in),
                    (stride, stride, 1))
        for kh in range(K):
            for kw in range(K):
                ph = phase[(kh % stride, kw % stride)]
                r0, c0 = kh // stride, kw // stride
                taps.append(lax.slice(ph, (r0, c0, 0), (r0 + TH, c0 + W_out, C_in)))

    # im2col: fuse the K*K taps into a single deep contraction for the MXU.
    # TODO(synk): the 9 concat chunks are C_in lanes wide (16 here, not 128-aligned)
    # and cost XLU lane-pack work comparable to the MXU pushes at small C_in; a
    # lane-dense repack (fold W into the lane dim) would fix it but needs an
    # in-kernel lane-splitting relayout -- kept on the simple, proven path here.
    patch = jnp.concatenate(taps, axis=-1)                # (TH, W_out, K*K*C_in)
    patch = patch.reshape(TH * W_out, K * K * C_in)       # sublane-only re-flatten

    acc = jnp.dot(patch, w_ref[...], preferred_element_type=jnp.float32)
    acc = acc + b_ref[...]                                # broadcast bias over pixels
    o_ref[...] = jnp.maximum(acc, 0.0).astype(o_ref.dtype)


def _p4_transform_filters(w):
    """P4ConvP4 filter transform (pure permutation, no arithmetic).

    w: (Cout, Cin, 4, K, K) -> (Cout, 4, Cin, 4, K, K) with
       tw[o, s, i, r] = rot90(w[o, i, (r - s) % 4], k=s)
    """
    return jnp.stack(
        [jnp.rot90(jnp.roll(w, s, axis=2), k=s, axes=(3, 4)) for s in range(4)],
        axis=1,
    )


def conv_bn_act_pallas(x, w, b, *, stride=1, kernel_size=3, row_tile=None):
    """Forward of ConvBNAct: P4ConvP4(in, out, k, padding=1, stride) + ReLU.

    x: (N, Cin, 4, H, W)   w: (Cout, Cin, 4, K, K)   b: (Cout,)
    returns: (N, Cout, 4, H_out, W_out) float32
    """
    # kernel_size == 0 (the module's padding=0 branch) is a degenerate conv; reject.
    assert kernel_size >= 1, "kernel_size must be >= 1"
    pad = 1
    N, Cin, G, H, W = x.shape
    Cout = w.shape[0]
    K = kernel_size
    assert G == 4 and w.shape == (Cout, Cin, 4, K, K)

    C_in_eff, C_out_eff = Cin * 4, Cout * 4

    # Output-channel lane padding: always a multiple of 128 (unmasked full-lane
    # stores).  For larger Cout bump to a 256 multiple when the extra pad is small
    # (full-width passes on the 256-lane v6e/v7x MXU; 128 stays right for v5e).
    C_out_pad = _round_up(C_out_eff, 128)
    if (C_out_eff > 128 and C_out_pad % 256 != 0
            and _round_up(C_out_eff, 256) - C_out_eff <= 64):
        C_out_pad = _round_up(C_out_eff, 256)
    # TODO(synk): for C_out_eff << 128 (this test: 32) most stored lanes are zero
    # pad; folding 128//C_out_eff output rows into the lane dim (or a bf16 output)
    # would cut the f32 writeback up to 8x on mem-bound shapes.

    # ---- p4 filter transform + layout plumbing (plain-JAX glue) ----
    tw = _p4_transform_filters(w)                         # (Cout, 4, Cin, 4, K, K)
    w_hwio = jnp.transpose(tw.reshape(C_out_eff, C_in_eff, K, K), (2, 3, 1, 0))
    w_mat = w_hwio.reshape(K * K * C_in_eff, C_out_eff)
    w_mat = jnp.pad(w_mat, ((0, 0), (0, C_out_pad - C_out_eff))).astype(jnp.bfloat16)
    b_eff = jnp.pad(jnp.repeat(b, 4), (0, C_out_pad - C_out_eff))
    b_eff = b_eff.reshape(1, C_out_pad).astype(jnp.float32)

    Hp, Wp = H + 2 * pad, W + 2 * pad
    H_out = (Hp - K) // stride + 1
    W_out = (Wp - K) // stride + 1

    # ---- output row-tile selection ----
    # TH must be a multiple of `need` so TH*W_out % 8 == 0 (sublane-aligned reshape
    # and unmasked stores).  Among such THs (capped so M = TH*W_out <= 1024),
    # minimize padded rows first, then the number of grid steps.
    need = 8 // math.gcd(W_out, 8)
    MAX_M = 1024
    if row_tile is not None:
        TH = max(need, (max(1, min(row_tile, H_out)) // need) * need)
        n_t = -(-H_out // TH)
    else:
        best = None
        th = need
        while th * W_out <= MAX_M or th == need:
            n_t_c = -(-H_out // th)
            waste = n_t_c * th - H_out
            score = (waste, n_t_c)
            if best is None or score < best[0]:
                best = (score, th, n_t_c)
            th += need
            if th > _round_up(H_out, need):
                break
        TH, n_t = best[1], best[2]
    H_out_pad = n_t * TH

    # NHWC + zero pad (rows also padded so the last, possibly partial, tile reads
    # in-bounds zeros), cast to bf16 for the MXU.
    # TODO(synk): fold the NCHW->NHWC transpose + zero-pad into the kernel (or keep
    # the model in flattened-p4 NHWC between layers) to drop one full HBM pass of
    # the activations -- the dominant remaining cost on v5e's ~0.82 TB/s HBM.
    # TODO(synk): with C_in_eff < 128 the (..., W, C) layout is lane-padded by
    # ~128/C_in_eff in HBM+VMEM; packing W into the lane dim would fix that at the
    # cost of an in-kernel lane-splitting relayout of the im2col taps.
    Hp_pad = max(Hp, (H_out_pad - 1) * stride + K)
    x_nhwc = jnp.transpose(x.reshape(N, C_in_eff, H, W), (0, 2, 3, 1))
    x_pad = jnp.pad(
        x_nhwc, ((0, 0), (pad, pad + (Hp_pad - Hp)), (pad, pad), (0, 0))
    ).astype(jnp.bfloat16)

    kernel = functools.partial(_p4_conv_relu_kernel, K=K, TH=TH, W_out=W_out,
                               stride=stride)

    # Explicit VMEM budget: double-buffered blocks + im2col/acc intermediates.
    lane = lambda c: _round_up(c, 128)
    sub = lambda s: _round_up(s, 8)
    x_blk = Hp_pad * sub(Wp) * lane(C_in_eff) * 2
    w_blk = sub(K * K * C_in_eff) * lane(C_out_pad) * 2
    b_blk = 8 * lane(C_out_pad) * 4
    o_blk = sub(TH * W_out) * lane(C_out_pad) * 4
    tmp = sub(TH * W_out) * (lane(K * K * C_in_eff) * 2 + lane(C_out_pad) * 4)
    vmem_est = 2 * (x_blk + w_blk + b_blk + o_blk) + tmp
    vmem_limit = int(min(96 << 20, max(32 << 20, int(1.25 * vmem_est) + (4 << 20))))
    # TODO(synk): for large H*W*C_in, switch x to memory_space=pl.ANY with a manual
    # double-buffered row-slab DMA (rows_in + halo per tile) so per-step VMEM stays
    # bounded on v7x's 64 MiB regardless of image size; weights/bias could also use
    # pipeline_mode=pl.Buffered(1) to drop their second (useless) VMEM buffer.

    flops = 2 * N * n_t * (TH * W_out) * (K * K * C_in_eff) * C_out_pad
    bytes_accessed = (x_pad.size * 2 + w_mat.size * 2 + b_eff.size * 4
                      + N * H_out_pad * W_out * C_out_pad * 4)

    out_flat = pl.pallas_call(
        kernel,
        out_shape=jax.ShapeDtypeStruct((N, H_out_pad * W_out, C_out_pad), jnp.float32),
        grid_spec=pltpu.PrefetchScalarGridSpec(
            num_scalar_prefetch=0,
            grid=(N, n_t),
            in_specs=[
                # Whole padded image per batch; block index ignores the row-tile axis,
                # so it stays resident in VMEM across the inner grid axis.
                pl.BlockSpec((None, Hp_pad, Wp, C_in_eff), lambda n, t: (n, 0, 0, 0)),
                pl.BlockSpec((K * K * C_in_eff, C_out_pad), lambda n, t: (0, 0)),
                pl.BlockSpec((1, C_out_pad), lambda n, t: (0, 0)),
            ],
            out_specs=pl.BlockSpec((None, TH * W_out, C_out_pad),
                                   lambda n, t: (n, t, 0)),
        ),
        compiler_params=pltpu.CompilerParams(
            dimension_semantics=("parallel", "parallel"),
            vmem_limit_bytes=vmem_limit),
        cost_estimate=pl.CostEstimate(flops=flops, transcendentals=0,
                                      bytes_accessed=bytes_accessed),
    )(x_pad, w_mat, b_eff)

    # Drop row/channel padding, restore (N, Cout, 4, H_out, W_out)  (XLA glue).
    out = out_flat[:, :H_out * W_out, :C_out_eff].reshape(N, H_out, W_out, C_out_eff)
    out = jnp.transpose(out, (0, 3, 1, 2)).reshape(N, Cout, 4, H_out, W_out)
    return out


def _reference(x, w, b, *, stride=1, kernel_size=3):
    """Pure-JAX (f32, HIGHEST precision) reference of the same semantics."""
    pad = 1
    N, Cin, _, H, W = x.shape
    Cout = w.shape[0]
    K = kernel_size
    tw = _p4_transform_filters(w).reshape(Cout * 4, Cin * 4, K, K)
    y = lax.conv_general_dilated(
        x.reshape(N, Cin * 4, H, W), tw,
        window_strides=(stride, stride), padding=[(pad, pad), (pad, pad)],
        dimension_numbers=("NCHW", "OIHW", "NCHW"),
        precision=lax.Precision.HIGHEST)
    y = y.reshape(N, Cout, 4, y.shape[-2], y.shape[-1]) + b.reshape(1, Cout, 1, 1, 1)
    return jnp.maximum(y, 0.0)


if __name__ == "__main__":
    # Small shapes consistent with the module: batch=2, in_filters=4,
    # out_filters=8, spatial=16, p4 group size=4, kernel_size=3, stride=1.
    N, IN_F, OUT_F, HW, K, STRIDE = 2, 4, 8, 16, 3, 1

    key = jax.random.PRNGKey(0)
    kx, kw_, kb = jax.random.split(key, 3)
    x = jax.random.normal(kx, (N, IN_F, 4, HW, HW), dtype=jnp.float32)
    fan_in = IN_F * 4 * K * K
    w = jax.random.normal(kw_, (OUT_F, IN_F, 4, K, K), dtype=jnp.float32) * (2.0 / fan_in) ** 0.5
    b = jax.random.normal(kb, (OUT_F,), dtype=jnp.float32) * 0.01

    out = jax.block_until_ready(conv_bn_act_pallas(x, w, b, stride=STRIDE, kernel_size=K))
    assert out.shape == (N, OUT_F, 4, HW, HW), out.shape

    # Rigorous check: same bf16 rounding of inputs/weights as the MXU path, f32 math.
    x_bf = x.astype(jnp.bfloat16).astype(jnp.float32)
    w_bf = w.astype(jnp.bfloat16).astype(jnp.float32)
    ref_bf = jax.block_until_ready(_reference(x_bf, w_bf, b, stride=STRIDE, kernel_size=K))
    assert jnp.allclose(out, ref_bf, atol=1e-3, rtol=1e-3), \
        f"mismatch vs bf16-rounded reference: {float(jnp.max(jnp.abs(out - ref_bf)))}"

    # Sanity check vs the pure-f32 reference (bf16 quantization tolerance).
    ref_f32 = jax.block_until_ready(_reference(x, w, b, stride=STRIDE, kernel_size=K))
    assert jnp.allclose(out, ref_f32, atol=5e-2, rtol=5e-2), \
        f"mismatch vs f32 reference: {float(jnp.max(jnp.abs(out - ref_f32)))}"

    print("KERNEL_OK")
</pallas_src>

<mosaic_0001>
module attributes {stable_mosaic.version = 11 : i64} {
  func.func @_p4_conv_relu_kernel(%arg0: i32, %arg1: i32, %arg2: memref<1x18x18x16xbf16, #tpu.memory_space<vmem>>, %arg3: memref<144x128xbf16, #tpu.memory_space<vmem>>, %arg4: memref<1x128xf32, #tpu.memory_space<vmem>>, %arg5: memref<1x256x128xf32, #tpu.memory_space<vmem>>) attributes {dimension_semantics = [#tpu.dimension_semantics<parallel>, #tpu.dimension_semantics<parallel>], iteration_bounds = array<i64: 2, 1>, scalar_prefetch = 0 : i64, scratch_operands = 0 : i64, tpu.core_type = #tpu.core_type<tc>, window_params = [{transform_indices = @transform_0, window_bounds = array<i64: 1, 18, 18, 16>}, {pipeline_mode = #tpu.pipeline_mode<synchronous>, transform_indices = @transform_1, window_bounds = array<i64: 144, 128>}, {pipeline_mode = #tpu.pipeline_mode<synchronous>, transform_indices = @transform_2, window_bounds = array<i64: 1, 128>}, {transform_indices = @transform_3, window_bounds = array<i64: 1, 256, 128>}]} {
    %c16_i32 = arith.constant 16 : i32
    %0 = arith.muli %arg1, %c16_i32 : i32
    %1 = tpu.assume_multiple %0, 16 : i32
    %c0 = arith.constant 0 : index
    %2 = arith.index_cast %1 : i32 to index
    %c0_0 = arith.constant 0 : index
    %c0_1 = arith.constant 0 : index
    %3 = vector.load %arg2[%c0, %2, %c0_0, %c0_1] : memref<1x18x18x16xbf16, #tpu.memory_space<vmem>>, vector<1x18x18x16xbf16>
    %4 = vector.shape_cast %3 : vector<1x18x18x16xbf16> to vector<18x18x16xbf16>
    %5 = vector.extract_strided_slice %4 {offsets = [0, 0, 0], sizes = [16, 16, 16], strides = [1, 1, 1]} : vector<18x18x16xbf16> to vector<16x16x16xbf16>
    %6 = vector.extract_strided_slice %4 {offsets = [0, 1, 0], sizes = [16, 16, 16], strides = [1, 1, 1]} : vector<18x18x16xbf16> to vector<16x16x16xbf16>
    %7 = vector.extract_strided_slice %4 {offsets = [0, 2, 0], sizes = [16, 16, 16], strides = [1, 1, 1]} : vector<18x18x16xbf16> to vector<16x16x16xbf16>
    %8 = vector.extract_strided_slice %4 {offsets = [1, 0, 0], sizes = [16, 16, 16], strides = [1, 1, 1]} : vector<18x18x16xbf16> to vector<16x16x16xbf16>
    %9 = vector.extract_strided_slice %4 {offsets = [1, 1, 0], sizes = [16, 16, 16], strides = [1, 1, 1]} : vector<18x18x16xbf16> to vector<16x16x16xbf16>
    %10 = vector.extract_strided_slice %4 {offsets = [1, 2, 0], sizes = [16, 16, 16], strides = [1, 1, 1]} : vector<18x18x16xbf16> to vector<16x16x16xbf16>
    %11 = vector.extract_strided_slice %4 {offsets = [2, 0, 0], sizes = [16, 16, 16], strides = [1, 1, 1]} : vector<18x18x16xbf16> to vector<16x16x16xbf16>
    %12 = vector.extract_strided_slice %4 {offsets = [2, 1, 0], sizes = [16, 16, 16], strides = [1, 1, 1]} : vector<18x18x16xbf16> to vector<16x16x16xbf16>
    %13 = vector.extract_strided_slice %4 {offsets = [2, 2, 0], sizes = [16, 16, 16], strides = [1, 1, 1]} : vector<18x18x16xbf16> to vector<16x16x16xbf16>
    %14 = tpu.concatenate %5, %6, %7, %8, %9, %10, %11, %12, %13 in 2 : vector<16x16x16xbf16>, vector<16x16x16xbf16>, vector<16x16x16xbf16>, vector<16x16x16xbf16>, vector<16x16x16xbf16>, vector<16x16x16xbf16>, vector<16x16x16xbf16>, vector<16x16x16xbf16>, vector<16x16x16xbf16> -> vector<16x16x144xbf16>
    %15 = vector.shape_cast %14 : vector<16x16x144xbf16> to vector<256x144xbf16>
    %c0_2 = arith.constant 0 : index
    %c0_3 = arith.constant 0 : index
    %16 = vector.load %arg3[%c0_2, %c0_3] : memref<144x128xbf16, #tpu.memory_space<vmem>>, vector<144x128xbf16>
    %cst = arith.constant dense<0.000000e+00> : vector<256x128xf32>
    %17 = tpu.matmul %15, %16, %cst {dimension_numbers = #tpu.dot_dimension_numbers<[1], [0], [0], [1], [0, 0, 1, 1], [], []>} : vector<256x144xbf16>, vector<144x128xbf16>, vector<256x128xf32> -> vector<256x128xf32>
    %c0_4 = arith.constant 0 : index
    %c0_5 = arith.constant 0 : index
    %18 = vector.load %arg4[%c0_4, %c0_5] : memref<1x128xf32, #tpu.memory_space<vmem>>, vector<1x128xf32>
    %19 = vector.broadcast %18 : vector<1x128xf32> to vector<256x128xf32>
    %20 = arith.addf %17, %19 : vector<256x128xf32>
    %cst_6 = arith.constant 0.000000e+00 : f32
    %21 = vector.broadcast %cst_6 : f32 to vector<256x128xf32>
    %22 = arith.maximumf %20, %21 : vector<256x128xf32>
    %c0_7 = arith.constant 0 : index
    %c0_8 = arith.constant 0 : index
    %c0_9 = arith.constant 0 : index
    %23 = vector.load %arg5[%c0_7, %c0_8, %c0_9] : memref<1x256x128xf32, #tpu.memory_space<vmem>>, vector<1x256x128xf32>
    %24 = vector.shape_cast %23 : vector<1x256x128xf32> to vector<256x128xf32>
    %25 = vector.shape_cast %22 : vector<256x128xf32> to vector<1x256x128xf32>
    tpu.vector_store %arg5[%c0_7, %c0_8, %c0_9], %25 {strides = array<i32>} : memref<1x256x128xf32, #tpu.memory_space<vmem>>, vector<1x256x128xf32>,
    return
  }
  func.func @transform_0(%arg0: i32, %arg1: i32) -> (i32, i32, i32, i32) {
    %c0_i32 = arith.constant 0 : i32
    %c0_i32_0 = arith.constant 0 : i32
    %c0_i32_1 = arith.constant 0 : i32
    %c0_i32_2 = arith.constant 0 : i32
    return %arg0, %c0_i32, %c0_i32_0, %c0_i32_1 : i32, i32, i32, i32
  }
  func.func @transform_1(%arg0: i32, %arg1: i32) -> (i32, i32) {
    %c0_i32 = arith.constant 0 : i32
    %c0_i32_0 = arith.constant 0 : i32
    %c0_i32_1 = arith.constant 0 : i32
    return %c0_i32, %c0_i32_0 : i32, i32
  }
  func.func @transform_2(%arg0: i32, %arg1: i32) -> (i32, i32) {
    %c0_i32 = arith.constant 0 : i32
    %c0_i32_0 = arith.constant 0 : i32
    %c0_i32_1 = arith.constant 0 : i32
    return %c0_i32, %c0_i32_0 : i32, i32
  }
  func.func @transform_3(%arg0: i32, %arg1: i32) -> (i32, i32, i32) {
    %c0_i32 = arith.constant 0 : i32
    %c0_i32_0 = arith.constant 0 : i32
    return %arg0, %arg1, %c0_i32 : i32, i32, i32
  }
}

</mosaic_0001>

<llo_original>
// kernel: tpu_custom_call.1
$region0: #{tpu_custom_call.1}
  #allocation0 [shape = 'u32[]', space=smem, size = 0x4, offset = 0x4, fixed_abs, tag = 'smem constant byte address 0x4 - core index']
  #allocation1 [shape = 'u32[144,128]{1,0:T(1,128)}', space=vmem, size = 0x12000, scoped, tag = 'internal scratch']
  %s0 = inlined_call_operand.vmem [shape: bf16[2,18,18,16], index: 0, kind: input, shape index: {}]
  %s1 = inlined_call_operand.vmem [shape: bf16[144,128], index: 1, kind: input, shape index: {}]
  %s2 = inlined_call_operand.vmem [shape: f32[1,128], index: 2, kind: input, shape index: {}]
  %s3 = inlined_call_operand.hbm [shape: f32[2,256,128], index: 3, kind: output, shape index: {}]
  %s4 = sld [smem:[#allocation0]]
  $region45: #{tpu_custom_call.1} parent=0
    _
  %s6 = ssub.s32 1, %s4
  %s7 = scalar_select 0, %s6, %s4
  $region1: #{tpu_custom_call.1} parent=0
    #allocation2 [shape = 'u8[262144]{0}', space=vmem, size = 0x40000, scoped, tag = 'output window, operand 0']
    #allocation3 [shape = 's32[2]{0}', space=sflag, size = 0x8, scoped, tag = 'scoped memory for tpu_custom_call.1']
    %8 = vsyncpa [#allocation3], 0
    %s9 = scalar_lea.sflag [#allocation3], 1
    %10 = vsyncpa %s9, 0
    loop: start=0, step=1, limit=4
    $region2: #{tpu_custom_call.1} parent=1 // loop_pre_header
      _
    $region3: #{tpu_custom_call.1} parent=1 // loop_header
      %s12 = sphi 0, %s16
      %p13 = scmp.ge.s32.totalorder %s12, 4
      %s19 = sphi 0, %s31
      %s20 = sphi 0, %s27
      %s21 = sphi 0, %s19
      %s22 = sphi 0, %s20
      %s23 = sphi 0, %s21
      %s24 = sphi 0, %s22
      %s34 = sphi 0, %s36
      %s37 = sphi 0, %s34
      %s38 = sphi 0, %s37
      %s54 = sphi 0, %s38
      %s58 = sphi 0, %s58
      %s60 = sphi 0, %s58
      %s61 = sphi 0, %s60
      %s75 = sphi 0, %s61
      %s79 = sphi 0, %s79
      %s81 = sphi 0, %s79
      %s82 = sphi 0, %s81
      %s96 = sphi 0, %s82
      %s104 = sphi 0, %s106
      %s107 = sphi 0, %s104
      %s108 = sphi 0, %s107
      %s124 = sphi 0, %s108
    $region4: #{tpu_custom_call.1} parent=1 // loop_header_branch
      %15 = sbr.rel (%p13) target = $region8
    $region5: #{tpu_custom_call.1} parent=1 // loop_body
      %s17 = ssub.s32 %s12, 1
      %s18 = ssub.s32 %s12, 2
      %s25 = sadd.s32 1, %s20
      %p26 = scmp.ge.s32.totalorder %s25, 1
      %s27 = scalar_select %p26, 0, %s25
      %s28 = sadd.s32 1, %s19
      %s29 = scalar_select %p26, %s28, %s19
      %p30 = scmp.ge.s32.totalorder %s29, 2
      %s31 = scalar_select %p30, 0, %s29
      %s32 = ssub.s32 %s19, %s31
      %p33 = scmp.eq.s32.totalorder %s32, 0
      %s35 = sadd.s32 %s34, 1
      %s36 = scalar_select %p33, %s34, %s35
      %p39 = pneg %p33
      %p40 = scmp.eq.s32.totalorder %s12, 1
      %p41 = por %p39, %p40
      %p42 = scmp.ne.s32.totalorder %s34, %s37
      %p43 = scmp.eq.s32.totalorder %s12, 0
      %p44 = por %p42, %p43
      %p45 = scmp.ne.s32.totalorder %s34, %s37
      %p46 = scmp.eq.s32.totalorder %s17, 1
      %p47 = por %p45, %p46
      %p48 = scmp.ne.s32.totalorder %s37, %s38
      %p49 = scmp.eq.s32.totalorder %s17, 0
      %p50 = por %p48, %p49
      %p51 = scmp.ne.s32.totalorder %s37, %s38
      %p52 = scmp.eq.s32.totalorder %s18, 1
      %p53 = por %p51, %p52
      %p55 = scmp.ne.s32.totalorder %s38, %s54
      %p56 = scmp.eq.s32.totalorder %s18, 0
      %p57 = por %p55, %p56
      %s59 = sadd.s32 %s58, 1
      %p62 = scmp.eq.s32.totalorder %s12, 1
      %p63 = scmp.ne.s32.totalorder %s58, %s60
      %p64 = scmp.eq.s32.totalorder %s12, 0
      %p65 = por %p63, %p64
      %p66 = scmp.ne.s32.totalorder %s58, %s60
      %p67 = scmp.eq.s32.totalorder %s17, 1
      %p68 = por %p66, %p67
      %p69 = scmp.ne.s32.totalorder %s60, %s61
      %p70 = scmp.eq.s32.totalorder %s17, 0
      %p71 = por %p69, %p70
      %p72 = scmp.ne.s32.totalorder %s60, %s61
      %p73 = scmp.eq.s32.totalorder %s18, 1
      %p74 = por %p72, %p73
      %p76 = scmp.ne.s32.totalorder %s61, %s75
      %p77 = scmp.eq.s32.totalorder %s18, 0
      %p78 = por %p76, %p77
      %s80 = sadd.s32 %s79, 1
      %p83 = scmp.eq.s32.totalorder %s12, 1
      %p84 = scmp.ne.s32.totalorder %s79, %s81
      %p85 = scmp.eq.s32.totalorder %s12, 0
      %p86 = por %p84, %p85
      %p87 = scmp.ne.s32.totalorder %s79, %s81
      %p88 = scmp.eq.s32.totalorder %s17, 1
      %p89 = por %p87, %p88
      %p90 = scmp.ne.s32.totalorder %s81, %s82
      %p91 = scmp.eq.s32.totalorder %s17, 0
      %p92 = por %p90, %p91
      %p93 = scmp.ne.s32.totalorder %s81, %s82
      %p94 = scmp.eq.s32.totalorder %s18, 1
      %p95 = por %p93, %p94
      %p97 = scmp.ne.s32.totalorder %s82, %s96
      %p98 = scmp.eq.s32.totalorder %s18, 0
      %p99 = por %p97, %p98
      %s100 = ssub.s32 %s19, %s31
      %s101 = ssub.s32 %s20, %s27
      %s102 = sor.u32 %s100, %s101
      %p103 = scmp.eq.s32.totalorder %s102, 0
      %s105 = sadd.s32 %s104, 1
      %s106 = scalar_select %p103, %s104, %s105
      %p109 = pneg %p103
      %p110 = scmp.eq.s32.totalorder %s12, 1
      %p111 = por %p109, %p110
      %p112 = scmp.ne.s32.totalorder %s104, %s107
      %p113 = scmp.eq.s32.totalorder %s12, 0
      %p114 = por %p112, %p113
      %p115 = scmp.ne.s32.totalorder %s104, %s107
      %p116 = scmp.eq.s32.totalorder %s17, 1
      %p117 = por %p115, %p116
      %p118 = scmp.ne.s32.totalorder %s107, %s108
      %p119 = scmp.eq.s32.totalorder %s17, 0
      %p120 = por %p118, %p119
      %p121 = scmp.ne.s32.totalorder %s107, %s108
      %p122 = scmp.eq.s32.totalorder %s18, 1
      %p123 = por %p121, %p122
      %p125 = scmp.ne.s32.totalorder %s108, %s124
      %p126 = scmp.eq.s32.totalorder %s18, 0
      %p127 = por %p125, %p126
      %p128 = scmp.le.s32.totalorder 1, %s12
      %p129 = scmp.lt.s32.totalorder %s12, 3
      %p130 = pnand %p128, %p129
      %p131 = pneg %p130
      // Predicated region
      $region9: #{tpu_custom_call.1} parent=5 // pred_check
        _
      $region10: #{tpu_custom_call.1} parent=5 // pred_check_branch
        %133 = sbr.rel (%p130) target = $region12
      $region11: #{tpu_custom_call.1} parent=5 // pred_region
        %s134 = ssub.s32 %s12, 1
        // Predicated region
        $region13: #{tpu_custom_call.1} parent=11 // pred_check
          %p135 = pneg %p71
        $region14: #{tpu_custom_call.1} parent=11 // pred_check_branch
          %137 = sbr.rel (%p135) target = $region16
        $region15: #{tpu_custom_call.1} parent=11 // pred_region
          _
        $region16: #{tpu_custom_call.1} parent=11 // pred_fallthru
          _
        // Predicated region
        $region17: #{tpu_custom_call.1} parent=11 // pred_check
          %p138 = pneg %p92
        $region18: #{tpu_custom_call.1} parent=11 // pred_check_branch
          %140 = sbr.rel (%p138) target = $region20
        $region19: #{tpu_custom_call.1} parent=11 // pred_region
          _
        $region20: #{tpu_custom_call.1} parent=11 // pred_fallthru
          _
      $region12: #{tpu_custom_call.1} parent=5 // pred_fallthru
        _
      %p141 = scmp.lt.s32.totalorder %s12, 2
      // Predicated region
      $region21: #{tpu_custom_call.1} parent=5 // pred_check
        %p142 = pneg %p141
      $region22: #{tpu_custom_call.1} parent=5 // pred_check_branch
        %144 = sbr.rel (%p142) target = $region24
      $region23: #{tpu_custom_call.1} parent=5 // pred_region
        // Predicated region
        $region25: #{tpu_custom_call.1} parent=23 // pred_check
          %p145 = pneg %p44
        $region26: #{tpu_custom_call.1} parent=23 // pred_check_branch
          %147 = sbr.rel (%p145) target = $region28
        $region27: #{tpu_custom_call.1} parent=23 // pred_region
          %p148 = scmp.lt.s32.totalorder %s19, 1
          %s149 = scalar_select %p148, %s19, 1
          %s150 = smul.addr %s149, 54
          %s151 = smul.addr %s150, 4
          %s152 = scalar_lea.vmem %s0, %s151
        $region28: #{tpu_custom_call.1} parent=23 // pred_fallthru
          _
      $region24: #{tpu_custom_call.1} parent=5 // pred_fallthru
        _
      %p153 = scmp.le.s32.totalorder 1, %s12
      %p154 = scmp.lt.s32.totalorder %s12, 3
      %p155 = pnand %p153, %p154
      %p156 = pneg %p155
      // Predicated region
      $region29: #{tpu_custom_call.1} parent=5 // pred_check
        _
      $region30: #{tpu_custom_call.1} parent=5 // pred_check_branch
        %158 = sbr.rel (%p155) target = $region32
      $region31: #{tpu_custom_call.1} parent=5 // pred_region
        %s159 = ssub.s32 %s12, 1
        %p160 = scmp.lt.s32.totalorder %s21, 1
        %s161 = scalar_select %p160, %s21, 1
        %s162 = smul.addr %s161, 54
        %s163 = smul.addr %s162, 4
        %s164 = scalar_lea.vmem %s0, %s163
        %p165 = pneg %p50
        %p166 = pneg %p47
        %p167 = pneg %p71
        %p168 = pneg %p68
        %p169 = pneg %p92
        %p170 = pneg %p89
        %p171 = pneg %p120
        %p172 = pneg %p117
        %s173 = sand.u32 %s107, 1
        %s174 = scalar_lea.sflag [#allocation3], %s173
        %s175 = sand.u32 %s107, 1
        %s176 = smul.addr %s175, 256
        %s177 = scalar_lea.vmem [#allocation2], %s176
        %p178 = scmp.lt.s32.totalorder %s21, 1
        %s179 = scalar_select %p178, %s21, 1
        %s180 = smul.addr %s179, 54
        %s181 = smul.addr %s180, 4
        %s182 = scalar_lea.vmem %s0, %s181
        %s183 = smul.u32 32, %s22
        %s185 = smul.u32 %s22, 16
        %s186 = smul.u32 %s185, 3
        %s187 = smul.addr %s186, 4
        %s188 = scalar_lea.vmem %s182, %s187
        %v189 = vld [vmem:[%s188] sm:$0xf]
        %v190 = vld [vmem:[%s188 + $0x4] sm:$0xf]
        %v191 = vld [vmem:[%s188 + $0x8] sm:$0x1]
        %v192 = vld [vmem:[%s188 + $0xc] sm:$0xf]
        %v193 = vld [vmem:[%s188 + $0x10] sm:$0xf]
        %v194 = vld [vmem:[%s188 + $0x14] sm:$0x1]
        %v195 = vld [vmem:[%s188 + $0x18] sm:$0xf]
        %v196 = vld [vmem:[%s188 + $0x1c] sm:$0xf]
        %v197 = vld [vmem:[%s188 + $0x20] sm:$0x1]
        %v198 = vld [vmem:[%s188 + $0x24] sm:$0xf]
        %v199 = vld [vmem:[%s188 + $0x28] sm:$0xf]
        %v200 = vld [vmem:[%s188 + $0x2c] sm:$0x1]
        %v201 = vld [vmem:[%s188 + $0x30] sm:$0xf]
        %v202 = vld [vmem:[%s188 + $0x34] sm:$0xf]
        %v203 = vld [vmem:[%s188 + $0x38] sm:$0x1]
        %v204 = vld [vmem:[%s188 + $0x3c] sm:$0xf]
        %v205 = vld [vmem:[%s188 + $0x40] sm:$0xf]
        %v206 = vld [vmem:[%s188 + $0x44] sm:$0x1]
        %v207 = vld [vmem:[%s188 + $0x48] sm:$0xf]
        %v208 = vld [vmem:[%s188 + $0x4c] sm:$0xf]
        %v209 = vld [vmem:[%s188 + $0x50] sm:$0x1]
        %v210 = vld [vmem:[%s188 + $0x54] sm:$0xf]
        %v211 = vld [vmem:[%s188 + $0x58] sm:$0xf]
        %v212 = vld [vmem:[%s188 + $0x5c] sm:$0x1]
        %v213 = vld [vmem:[%s188 + $0x60] sm:$0xf]
        %v214 = vld [vmem:[%s188 + $0x64] sm:$0xf]
        %v215 = vld [vmem:[%s188 + $0x68] sm:$0x1]
        %v216 = vld [vmem:[%s188 + $0x6c] sm:$0xf]
        %v217 = vld [vmem:[%s188 + $0x70] sm:$0xf]
        %v218 = vld [vmem:[%s188 + $0x74] sm:$0x1]
        %v219 = vld [vmem:[%s188 + $0x78] sm:$0xf]
        %v220 = vld [vmem:[%s188 + $0x7c] sm:$0xf]
        %v221 = vld [vmem:[%s188 + $0x80] sm:$0x1]
        %v222 = vld [vmem:[%s188 + $0x84] sm:$0xf]
        %v223 = vld [vmem:[%s188 + $0x88] sm:$0xf]
        %v224 = vld [vmem:[%s188 + $0x8c] sm:$0x1]
        %v225 = vld [vmem:[%s188 + $0x90] sm:$0xf]
        %v226 = vld [vmem:[%s188 + $0x94] sm:$0xf]
        %v227 = vld [vmem:[%s188 + $0x98] sm:$0x1]
        %v228 = vld [vmem:[%s188 + $0x9c] sm:$0xf]
        %v229 = vld [vmem:[%s188 + $0xa0] sm:$0xf]
        %v230 = vld [vmem:[%s188 + $0xa4] sm:$0x1]
        %v231 = vld [vmem:[%s188 + $0xa8] sm:$0xf]
        %v232 = vld [vmem:[%s188 + $0xac] sm:$0xf]
        %v233 = vld [vmem:[%s188 + $0xb0] sm:$0x1]
        %v234 = vld [vmem:[%s188 + $0xb4] sm:$0xf]
        %v235 = vld [vmem:[%s188 + $0xb8] sm:$0xf]
        %v236 = vld [vmem:[%s188 + $0xbc] sm:$0x1]
        %v237 = vld [vmem:[%s188 + $0xc0] sm:$0xf]
        %v238 = vld [vmem:[%s188 + $0xc4] sm:$0xf]
        %v239 = vld [vmem:[%s188 + $0xc8] sm:$0x1]
        %v240 = vld [vmem:[%s188 + $0xcc] sm:$0xf]
        %v241 = vld [vmem:[%s188 + $0xd0] sm:$0xf]
        %v242 = vld [vmem:[%s188 + $0xd4] sm:$0x1]
        %v275 = vunpack.c.l.b16 %v189
        %v276 = vunpack.c.l.b16 %v190
        %v277 = vunpack.c.l.b16 %v192
        %v278 = vunpack.c.l.b16 %v193
        %v279 = vunpack.c.l.b16 %v195
        %v280 = vunpack.c.l.b16 %v196
        %v281 = vunpack.c.l.b16 %v198
        %v282 = vunpack.c.l.b16 %v199
        %v283 = vunpack.c.l.b16 %v201
        %v284 = vunpack.c.l.b16 %v202
        %v285 = vunpack.c.l.b16 %v204
        %v286 = vunpack.c.l.b16 %v205
        %v287 = vunpack.c.l.b16 %v207
        %v288 = vunpack.c.l.b16 %v208
        %v289 = vunpack.c.l.b16 %v210
        %v290 = vunpack.c.l.b16 %v211
        %v291 = vunpack.c.l.b16 %v213
        %v292 = vunpack.c.l.b16 %v214
        %v293 = vunpack.c.l.b16 %v216
        %v294 = vunpack.c.l.b16 %v217
        %v295 = vunpack.c.l.b16 %v219
        %v296 = vunpack.c.l.b16 %v220
        %v297 = vunpack.c.l.b16 %v222
        %v298 = vunpack.c.l.b16 %v223
        %v299 = vunpack.c.l.b16 %v225
        %v300 = vunpack.c.l.b16 %v226
        %v301 = vunpack.c.l.b16 %v228
        %v302 = vunpack.c.l.b16 %v229
        %v303 = vunpack.c.l.b16 %v231
        %v304 = vunpack.c.l.b16 %v232
        %v305 = vunpack.c.l.b16 %v234
        %v306 = vunpack.c.l.b16 %v235
        %v307 = vpack.c.b16 %v276, %v275
        %v308 = vpack.c.b16 %v278, %v277
        %v309 = vpack.c.b16 %v280, %v279
        %v310 = vpack.c.b16 %v282, %v281
        %v311 = vpack.c.b16 %v284, %v283
        %v312 = vpack.c.b16 %v286, %v285
        %v313 = vpack.c.b16 %v288, %v287
        %v314 = vpack.c.b16 %v290, %v289
        %v315 = vpack.c.b16 %v292, %v291
        %v316 = vpack.c.b16 %v294, %v293
        %v317 = vpack.c.b16 %v296, %v295
        %v318 = vpack.c.b16 %v298, %v297
        %v319 = vpack.c.b16 %v300, %v299
        %v320 = vpack.c.b16 %v302, %v301
        %v321 = vpack.c.b16 %v304, %v303
        %v322 = vpack.c.b16 %v306, %v305
        %v339 = vunpack.c.l.b16 %v191
        %v340 = vunpack.c.l.b16 %v194
        %v341 = vunpack.c.l.b16 %v197
        %v342 = vunpack.c.l.b16 %v200
        %v343 = vunpack.c.l.b16 %v203
        %v344 = vunpack.c.l.b16 %v206
        %v345 = vunpack.c.l.b16 %v209
        %v346 = vunpack.c.l.b16 %v212
        %v347 = vunpack.c.l.b16 %v215
        %v348 = vunpack.c.l.b16 %v218
        %v349 = vunpack.c.l.b16 %v221
        %v350 = vunpack.c.l.b16 %v224
        %v351 = vunpack.c.l.b16 %v227
        %v352 = vunpack.c.l.b16 %v230
        %v353 = vunpack.c.l.b16 %v233
        %v354 = vunpack.c.l.b16 %v236
        %v355 = vpack.c.b16 %v339, %v339
        %v356 = vpack.c.b16 %v340, %v340
        %v357 = vpack.c.b16 %v341, %v341
        %v358 = vpack.c.b16 %v342, %v342
        %v359 = vpack.c.b16 %v343, %v343
        %v360 = vpack.c.b16 %v344, %v344
        %v361 = vpack.c.b16 %v345, %v345
        %v362 = vpack.c.b16 %v346, %v346
        %v363 = vpack.c.b16 %v347, %v347
        %v364 = vpack.c.b16 %v348, %v348
        %v365 = vpack.c.b16 %v349, %v349
        %v366 = vpack.c.b16 %v350, %v350
        %v367 = vpack.c.b16 %v351, %v351
        %v368 = vpack.c.b16 %v352, %v352
        %v369 = vpack.c.b16 %v353, %v353
        %v370 = vpack.c.b16 %v354, %v354
        %vm371 = vsmask.f32 7424
        %v373 = vshrl.u32 %v307, 16
        %v375 = vshll.u32 %v307, 16
        %v377 = vrot.slane %v375, 1
        %v378 = vor.u32 %v373, %v377
        %v380 = vshll.u32 %v355, 16
        %v382 = vrot.slane %v380, 1
        %v383 = vsel %vm371, %v378, %v382
        %v385 = vshrl.u32 %v308, 16
        %v387 = vshll.u32 %v308, 16
        %v389 = vrot.slane %v387, 1
        %v390 = vor.u32 %v385, %v389
        %v392 = vshll.u32 %v356, 16
        %v394 = vrot.slane %v392, 1
        %v395 = vsel %vm371, %v390, %v394
        %v397 = vshrl.u32 %v309, 16
        %v399 = vshll.u32 %v309, 16
        %v401 = vrot.slane %v399, 1
        %v402 = vor.u32 %v397, %v401
        %v404 = vshll.u32 %v357, 16
        %v406 = vrot.slane %v404, 1
        %v407 = vsel %vm371, %v402, %v406
        %v409 = vshrl.u32 %v310, 16
        %v411 = vshll.u32 %v310, 16
        %v413 = vrot.slane %v411, 1
        %v414 = vor.u32 %v409, %v413
        %v416 = vshll.u32 %v358, 16
        %v418 = vrot.slane %v416, 1
        %v419 = vsel %vm371, %v414, %v418
        %v421 = vshrl.u32 %v311, 16
        %v423 = vshll.u32 %v311, 16
        %v425 = vrot.slane %v423, 1
        %v426 = vor.u32 %v421, %v425
        %v428 = vshll.u32 %v359, 16
        %v430 = vrot.slane %v428, 1
        %v431 = vsel %vm371, %v426, %v430
        %v433 = vshrl.u32 %v312, 16
        %v435 = vshll.u32 %v312, 16
        %v437 = vrot.slane %v435, 1
        %v438 = vor.u32 %v433, %v437
        %v440 = vshll.u32 %v360, 16
        %v442 = vrot.slane %v440, 1
        %v443 = vsel %vm371, %v438, %v442
        %v445 = vshrl.u32 %v313, 16
        %v447 = vshll.u32 %v313, 16
        %v449 = vrot.slane %v447, 1
        %v450 = vor.u32 %v445, %v449
        %v452 = vshll.u32 %v361, 16
        %v454 = vrot.slane %v452, 1
        %v455 = vsel %vm371, %v450, %v454
        %v457 = vshrl.u32 %v314, 16
        %v459 = vshll.u32 %v314, 16
        %v461 = vrot.slane %v459, 1
        %v462 = vor.u32 %v457, %v461
        %v464 = vshll.u32 %v362, 16
        %v466 = vrot.slane %v464, 1
        %v467 = vsel %vm371, %v462, %v466
        %v469 = vshrl.u32 %v315, 16
        %v471 = vshll.u32 %v315, 16
        %v473 = vrot.slane %v471, 1
        %v474 = vor.u32 %v469, %v473
        %v476 = vshll.u32 %v363, 16
        %v478 = vrot.slane %v476, 1
        %v479 = vsel %vm371, %v474, %v478
        %v481 = vshrl.u32 %v316, 16
        %v483 = vshll.u32 %v316, 16
        %v485 = vrot.slane %v483, 1
        %v486 = vor.u32 %v481, %v485
        %v488 = vshll.u32 %v364, 16
        %v490 = vrot.slane %v488, 1
        %v491 = vsel %vm371, %v486, %v490
        %v493 = vshrl.u32 %v317, 16
        %v495 = vshll.u32 %v317, 16
        %v497 = vrot.slane %v495, 1
        %v498 = vor.u32 %v493, %v497
        %v500 = vshll.u32 %v365, 16
        %v502 = vrot.slane %v500, 1
        %v503 = vsel %vm371, %v498, %v502
        %v505 = vshrl.u32 %v318, 16
        %v507 = vshll.u32 %v318, 16
        %v509 = vrot.slane %v507, 1
        %v510 = vor.u32 %v505, %v509
        %v512 = vshll.u32 %v366, 16
        %v514 = vrot.slane %v512, 1
        %v515 = vsel %vm371, %v510, %v514
        %v517 = vshrl.u32 %v319, 16
        %v519 = vshll.u32 %v319, 16
        %v521 = vrot.slane %v519, 1
        %v522 = vor.u32 %v517, %v521
        %v524 = vshll.u32 %v367, 16
        %v526 = vrot.slane %v524, 1
        %v527 = vsel %vm371, %v522, %v526
        %v529 = vshrl.u32 %v320, 16
        %v531 = vshll.u32 %v320, 16
        %v533 = vrot.slane %v531, 1
        %v534 = vor.u32 %v529, %v533
        %v536 = vshll.u32 %v368, 16
        %v538 = vrot.slane %v536, 1
        %v539 = vsel %vm371, %v534, %v538
        %v541 = vshrl.u32 %v321, 16
        %v543 = vshll.u32 %v321, 16
        %v545 = vrot.slane %v543, 1
        %v546 = vor.u32 %v541, %v545
        %v548 = vshll.u32 %v369, 16
        %v550 = vrot.slane %v548, 1
        %v551 = vsel %vm371, %v546, %v550
        %v553 = vshrl.u32 %v322, 16
        %v555 = vshll.u32 %v322, 16
        %v557 = vrot.slane %v555, 1
        %v558 = vor.u32 %v553, %v557
        %v560 = vshll.u32 %v370, 16
        %v562 = vrot.slane %v560, 1
        %v563 = vsel %vm371, %v558, %v562
        %564 = vrot.lane.b32.xlu0 %v383, 16
        %v565 = vpop.permute.xlu0 %564
        %566 = vrot.lane.b32.xlu0 %v395, 16
        %v567 = vpop.permute.xlu0 %566
        %568 = vrot.lane.b32.xlu0 %v407, 16
        %v569 = vpop.permute.xlu0 %568
        %570 = vrot.lane.b32.xlu0 %v419, 16
        %v571 = vpop.permute.xlu0 %570
        %572 = vrot.lane.b32.xlu0 %v431, 16
        %v573 = vpop.permute.xlu0 %572
        %574 = vrot.lane.b32.xlu0 %v443, 16
        %v575 = vpop.permute.xlu0 %574
        %576 = vrot.lane.b32.xlu0 %v455, 16
        %v577 = vpop.permute.xlu0 %576
        %578 = vrot.lane.b32.xlu0 %v467, 16
        %v579 = vpop.permute.xlu0 %578
        %580 = vrot.lane.b32.xlu0 %v479, 16
        %v581 = vpop.permute.xlu0 %580
        %582 = vrot.lane.b32.xlu0 %v491, 16
        %v583 = vpop.permute.xlu0 %582
        %584 = vrot.lane.b32.xlu0 %v503, 16
        %v585 = vpop.permute.xlu0 %584
        %586 = vrot.lane.b32.xlu0 %v515, 16
        %v587 = vpop.permute.xlu0 %586
        %588 = vrot.lane.b32.xlu0 %v527, 16
        %v589 = vpop.permute.xlu0 %588
        %590 = vrot.lane.b32.xlu0 %v539, 16
        %v591 = vpop.permute.xlu0 %590
        %592 = vrot.lane.b32.xlu0 %v551, 16
        %v593 = vpop.permute.xlu0 %592
        %594 = vrot.lane.b32.xlu0 %v563, 16
        %v595 = vpop.permute.xlu0 %594
        %vm596 = vcmask 1046528
        %v597 = vrot.slane %v307, 1
        %v598 = vrot.slane %v355, 1
        %v599 = vsel %vm596, %v597, %v598
        %v600 = vrot.slane %v308, 1
        %v601 = vrot.slane %v356, 1
        %v602 = vsel %vm596, %v600, %v601
        %v603 = vrot.slane %v309, 1
        %v604 = vrot.slane %v357, 1
        %v605 = vsel %vm596, %v603, %v604
        %v606 = vrot.slane %v310, 1
        %v607 = vrot.slane %v358, 1
        %v608 = vsel %vm596, %v606, %v607
        %v609 = vrot.slane %v311, 1
        %v610 = vrot.slane %v359, 1
        %v611 = vsel %vm596, %v609, %v610
        %v612 = vrot.slane %v312, 1
        %v613 = vrot.slane %v360, 1
        %v614 = vsel %vm596, %v612, %v613
        %v615 = vrot.slane %v313, 1
        %v616 = vrot.slane %v361, 1
        %v617 = vsel %vm596, %v615, %v616
        %v618 = vrot.slane %v314, 1
        %v619 = vrot.slane %v362, 1
        %v620 = vsel %vm596, %v618, %v619
        %v621 = vrot.slane %v315, 1
        %v622 = vrot.slane %v363, 1
        %v623 = vsel %vm596, %v621, %v622
        %v624 = vrot.slane %v316, 1
        %v625 = vrot.slane %v364, 1
        %v626 = vsel %vm596, %v624, %v625
        %v627 = vrot.slane %v317, 1
        %v628 = vrot.slane %v365, 1
        %v629 = vsel %vm596, %v627, %v628
        %v630 = vrot.slane %v318, 1
        %v631 = vrot.slane %v366, 1
        %v632 = vsel %vm596, %v630, %v631
        %v633 = vrot.slane %v319, 1
        %v634 = vrot.slane %v367, 1
        %v635 = vsel %vm596, %v633, %v634
        %v636 = vrot.slane %v320, 1
        %v637 = vrot.slane %v368, 1
        %v638 = vsel %vm596, %v636, %v637
        %v639 = vrot.slane %v321, 1
        %v640 = vrot.slane %v369, 1
        %v641 = vsel %vm596, %v639, %v640
        %v642 = vrot.slane %v322, 1
        %v643 = vrot.slane %v370, 1
        %v644 = vsel %vm596, %v642, %v643
        %645 = vrot.lane.b32.xlu0 %v599, 32
        %v646 = vpop.permute.xlu0 %645
        %647 = vrot.lane.b32.xlu0 %v602, 32
        %v648 = vpop.permute.xlu0 %647
        %649 = vrot.lane.b32.xlu0 %v605, 32
        %v650 = vpop.permute.xlu0 %649
        %651 = vrot.lane.b32.xlu0 %v608, 32
        %v652 = vpop.permute.xlu0 %651
        %653 = vrot.lane.b32.xlu0 %v611, 32
        %v654 = vpop.permute.xlu0 %653
        %655 = vrot.lane.b32.xlu0 %v614, 32
        %v656 = vpop.permute.xlu0 %655
        %657 = vrot.lane.b32.xlu0 %v617, 32
        %v658 = vpop.permute.xlu0 %657
        %659 = vrot.lane.b32.xlu0 %v620, 32
        %v660 = vpop.permute.xlu0 %659
        %661 = vrot.lane.b32.xlu0 %v623, 32
        %v662 = vpop.permute.xlu0 %661
        %663 = vrot.lane.b32.xlu0 %v626, 32
        %v664 = vpop.permute.xlu0 %663
        %665 = vrot.lane.b32.xlu0 %v629, 32
        %v666 = vpop.permute.xlu0 %665
        %667 = vrot.lane.b32.xlu0 %v632, 32
        %v668 = vpop.permute.xlu0 %667
        %669 = vrot.lane.b32.xlu0 %v635, 32
        %v670 = vpop.permute.xlu0 %669
        %671 = vrot.lane.b32.xlu0 %v638, 32
        %v672 = vpop.permute.xlu0 %671
        %673 = vrot.lane.b32.xlu0 %v641, 32
        %v674 = vpop.permute.xlu0 %673
        %675 = vrot.lane.b32.xlu0 %v644, 32
        %v676 = vpop.permute.xlu0 %675
        %v679 = vunpack.c.l.b16 %v237
        %v680 = vunpack.c.l.b16 %v238
        %v681 = vpack.c.b16 %v680, %v679
        %682 = vrot.lane.b32.xlu0 %v308, 48
        %v683 = vpop.permute.xlu0 %682
        %684 = vrot.lane.b32.xlu0 %v309, 48
        %v685 = vpop.permute.xlu0 %684
        %686 = vrot.lane.b32.xlu0 %v310, 48
        %v687 = vpop.permute.xlu0 %686
        %688 = vrot.lane.b32.xlu0 %v311, 48
        %v689 = vpop.permute.xlu0 %688
        %690 = vrot.lane.b32.xlu0 %v312, 48
        %v691 = vpop.permute.xlu0 %690
        %692 = vrot.lane.b32.xlu0 %v313, 48
        %v693 = vpop.permute.xlu0 %692
        %694 = vrot.lane.b32.xlu0 %v314, 48
        %v695 = vpop.permute.xlu0 %694
        %696 = vrot.lane.b32.xlu0 %v315, 48
        %v697 = vpop.permute.xlu0 %696
        %698 = vrot.lane.b32.xlu0 %v316, 48
        %v699 = vpop.permute.xlu0 %698
        %700 = vrot.lane.b32.xlu0 %v317, 48
        %v701 = vpop.permute.xlu0 %700
        %702 = vrot.lane.b32.xlu0 %v318, 48
        %v703 = vpop.permute.xlu0 %702
        %704 = vrot.lane.b32.xlu0 %v319, 48
        %v705 = vpop.permute.xlu0 %704
        %706 = vrot.lane.b32.xlu0 %v320, 48
        %v707 = vpop.permute.xlu0 %706
        %708 = vrot.lane.b32.xlu0 %v321, 48
        %v709 = vpop.permute.xlu0 %708
        %710 = vrot.lane.b32.xlu0 %v322, 48
        %v711 = vpop.permute.xlu0 %710
        %712 = vrot.lane.b32.xlu0 %v681, 48
        %v713 = vpop.permute.xlu0 %712
        %v715 = vunpack.c.l.b16 %v239
        %v716 = vpack.c.b16 %v715, %v715
        %v718 = vshrl.u32 %v681, 16
        %v720 = vshll.u32 %v681, 16
        %v722 = vrot.slane %v720, 1
        %v723 = vor.u32 %v718, %v722
        %v725 = vshll.u32 %v716, 16
        %v727 = vrot.slane %v725, 1
        %v728 = vsel %vm371, %v723, %v727
        %729 = vrot.lane.b32.xlu0 %v395, 64
        %v730 = vpop.permute.xlu0 %729
        %731 = vrot.lane.b32.xlu0 %v407, 64
        %v732 = vpop.permute.xlu0 %731
        %733 = vrot.lane.b32.xlu0 %v419, 64
        %v734 = vpop.permute.xlu0 %733
        %735 = vrot.lane.b32.xlu0 %v431, 64
        %v736 = vpop.permute.xlu0 %735
        %737 = vrot.lane.b32.xlu0 %v443, 64
        %v738 = vpop.permute.xlu0 %737
        %739 = vrot.lane.b32.xlu0 %v455, 64
        %v740 = vpop.permute.xlu0 %739
        %741 = vrot.lane.b32.xlu0 %v467, 64
        %v742 = vpop.permute.xlu0 %741
        %743 = vrot.lane.b32.xlu0 %v479, 64
        %v744 = vpop.permute.xlu0 %743
        %745 = vrot.lane.b32.xlu0 %v491, 64
        %v746 = vpop.permute.xlu0 %745
        %747 = vrot.lane.b32.xlu0 %v503, 64
        %v748 = vpop.permute.xlu0 %747
        %749 = vrot.lane.b32.xlu0 %v515, 64
        %v750 = vpop.permute.xlu0 %749
        %751 = vrot.lane.b32.xlu0 %v527, 64
        %v752 = vpop.permute.xlu0 %751
        %753 = vrot.lane.b32.xlu0 %v539, 64
        %v754 = vpop.permute.xlu0 %753
        %755 = vrot.lane.b32.xlu0 %v551, 64
        %v756 = vpop.permute.xlu0 %755
        %757 = vrot.lane.b32.xlu0 %v563, 64
        %v758 = vpop.permute.xlu0 %757
        %759 = vrot.lane.b32.xlu0 %v728, 64
        %v760 = vpop.permute.xlu0 %759
        %v761 = vrot.slane %v681, 1
        %v762 = vrot.slane %v716, 1
        %v763 = vsel %vm596, %v761, %v762
        %764 = vrot.lane.b32.xlu0 %v602, 80
        %v765 = vpop.permute.xlu0 %764
        %766 = vrot.lane.b32.xlu0 %v605, 80
        %v767 = vpop.permute.xlu0 %766
        %768 = vrot.lane.b32.xlu0 %v608, 80
        %v769 = vpop.permute.xlu0 %768
        %770 = vrot.lane.b32.xlu0 %v611, 80
        %v771 = vpop.permute.xlu0 %770
        %772 = vrot.lane.b32.xlu0 %v614, 80
        %v773 = vpop.permute.xlu0 %772
        %774 = vrot.lane.b32.xlu0 %v617, 80
        %v775 = vpop.permute.xlu0 %774
        %776 = vrot.lane.b32.xlu0 %v620, 80
        %v777 = vpop.permute.xlu0 %776
        %778 = vrot.lane.b32.xlu0 %v623, 80
        %v779 = vpop.permute.xlu0 %778
        %780 = vrot.lane.b32.xlu0 %v626, 80
        %v781 = vpop.permute.xlu0 %780
        %782 = vrot.lane.b32.xlu0 %v629, 80
        %v783 = vpop.permute.xlu0 %782
        %784 = vrot.lane.b32.xlu0 %v632, 80
        %v785 = vpop.permute.xlu0 %784
        %786 = vrot.lane.b32.xlu0 %v635, 80
        %v787 = vpop.permute.xlu0 %786
        %788 = vrot.lane.b32.xlu0 %v638, 80
        %v789 = vpop.permute.xlu0 %788
        %790 = vrot.lane.b32.xlu0 %v641, 80
        %v791 = vpop.permute.xlu0 %790
        %792 = vrot.lane.b32.xlu0 %v644, 80
        %v793 = vpop.permute.xlu0 %792
        %794 = vrot.lane.b32.xlu0 %v763, 80
        %v795 = vpop.permute.xlu0 %794
        %v798 = vunpack.c.l.b16 %v240
        %v799 = vunpack.c.l.b16 %v241
        %v800 = vpack.c.b16 %v799, %v798
        %801 = vrot.lane.b32.xlu0 %v309, 96
        %v802 = vpop.permute.xlu0 %801
        %803 = vrot.lane.b32.xlu0 %v310, 96
        %v804 = vpop.permute.xlu0 %803
        %805 = vrot.lane.b32.xlu0 %v311, 96
        %v806 = vpop.permute.xlu0 %805
        %807 = vrot.lane.b32.xlu0 %v312, 96
        %v808 = vpop.permute.xlu0 %807
        %809 = vrot.lane.b32.xlu0 %v313, 96
        %v810 = vpop.permute.xlu0 %809
        %811 = vrot.lane.b32.xlu0 %v314, 96
        %v812 = vpop.permute.xlu0 %811
        %813 = vrot.lane.b32.xlu0 %v315, 96
        %v814 = vpop.permute.xlu0 %813
        %815 = vrot.lane.b32.xlu0 %v316, 96
        %v816 = vpop.permute.xlu0 %815
        %817 = vrot.lane.b32.xlu0 %v317, 96
        %v818 = vpop.permute.xlu0 %817
        %819 = vrot.lane.b32.xlu0 %v318, 96
        %v820 = vpop.permute.xlu0 %819
        %821 = vrot.lane.b32.xlu0 %v319, 96
        %v822 = vpop.permute.xlu0 %821
        %823 = vrot.lane.b32.xlu0 %v320, 96
        %v824 = vpop.permute.xlu0 %823
        %825 = vrot.lane.b32.xlu0 %v321, 96
        %v826 = vpop.permute.xlu0 %825
        %827 = vrot.lane.b32.xlu0 %v322, 96
        %v828 = vpop.permute.xlu0 %827
        %829 = vrot.lane.b32.xlu0 %v681, 96
        %v830 = vpop.permute.xlu0 %829
        %831 = vrot.lane.b32.xlu0 %v800, 96
        %v832 = vpop.permute.xlu0 %831
        %v834 = vunpack.c.l.b16 %v242
        %v835 = vpack.c.b16 %v834, %v834
        %v837 = vshrl.u32 %v800, 16
        %v839 = vshll.u32 %v800, 16
        %v841 = vrot.slane %v839, 1
        %v842 = vor.u32 %v837, %v841
        %v844 = vshll.u32 %v835, 16
        %v846 = vrot.slane %v844, 1
        %v847 = vsel %vm371, %v842, %v846
        %848 = vrot.lane.b32.xlu0 %v407, 112
        %v849 = vpop.permute.xlu0 %848
        %850 = vrot.lane.b32.xlu0 %v419, 112
        %v851 = vpop.permute.xlu0 %850
        %852 = vrot.lane.b32.xlu0 %v431, 112
        %v853 = vpop.permute.xlu0 %852
        %854 = vrot.lane.b32.xlu0 %v443, 112
        %v855 = vpop.permute.xlu0 %854
        %856 = vrot.lane.b32.xlu0 %v455, 112
        %v857 = vpop.permute.xlu0 %856
        %858 = vrot.lane.b32.xlu0 %v467, 112
        %v859 = vpop.permute.xlu0 %858
        %860 = vrot.lane.b32.xlu0 %v479, 112
        %v861 = vpop.permute.xlu0 %860
        %862 = vrot.lane.b32.xlu0 %v491, 112
        %v863 = vpop.permute.xlu0 %862
        %864 = vrot.lane.b32.xlu0 %v503, 112
        %v865 = vpop.permute.xlu0 %864
        %866 = vrot.lane.b32.xlu0 %v515, 112
        %v867 = vpop.permute.xlu0 %866
        %868 = vrot.lane.b32.xlu0 %v527, 112
        %v869 = vpop.permute.xlu0 %868
        %870 = vrot.lane.b32.xlu0 %v539, 112
        %v871 = vpop.permute.xlu0 %870
        %872 = vrot.lane.b32.xlu0 %v551, 112
        %v873 = vpop.permute.xlu0 %872
        %874 = vrot.lane.b32.xlu0 %v563, 112
        %v875 = vpop.permute.xlu0 %874
        %876 = vrot.lane.b32.xlu0 %v728, 112
        %v877 = vpop.permute.xlu0 %876
        %878 = vrot.lane.b32.xlu0 %v847, 112
        %v879 = vpop.permute.xlu0 %878
        %v880 = vrot.slane %v800, 1
        %v881 = vrot.slane %v835, 1
        %v882 = vsel %vm596, %v880, %v881
        %vm883 = vcmask 130048
        %v885 = vsel %vm883, %v307, %v565
        %v887 = vsel %vm883, %v308, %v567
        %v889 = vsel %vm883, %v309, %v569
        %v891 = vsel %vm883, %v310, %v571
        %v893 = vsel %vm883, %v311, %v573
        %v895 = vsel %vm883, %v312, %v575
        %v897 = vsel %vm883, %v313, %v577
        %v899 = vsel %vm883, %v314, %v579
        %v901 = vsel %vm883, %v315, %v581
        %v903 = vsel %vm883, %v316, %v583
        %v905 = vsel %vm883, %v317, %v585
        %v907 = vsel %vm883, %v318, %v587
        %v909 = vsel %vm883, %v319, %v589
        %v911 = vsel %vm883, %v320, %v591
        %v913 = vsel %vm883, %v321, %v593
        %v915 = vsel %vm883, %v322, %v595
        %vm916 = vcmask 261120
        %v918 = vsel %vm916, %v885, %v646
        %v920 = vsel %vm916, %v887, %v648
        %v922 = vsel %vm916, %v889, %v650
        %v924 = vsel %vm916, %v891, %v652
        %v926 = vsel %vm916, %v893, %v654
        %v928 = vsel %vm916, %v895, %v656
        %v930 = vsel %vm916, %v897, %v658
        %v932 = vsel %vm916, %v899, %v660
        %v934 = vsel %vm916, %v901, %v662
        %v936 = vsel %vm916, %v903, %v664
        %v938 = vsel %vm916, %v905, %v666
        %v940 = vsel %vm916, %v907, %v668
        %v942 = vsel %vm916, %v909, %v670
        %v944 = vsel %vm916, %v911, %v672
        %v946 = vsel %vm916, %v913, %v674
        %v948 = vsel %vm916, %v915, %v676
        %vm949 = vcmask 392192
        %v951 = vsel %vm949, %v918, %v683
        %v953 = vsel %vm949, %v920, %v685
        %v955 = vsel %vm949, %v922, %v687
        %v957 = vsel %vm949, %v924, %v689
        %v959 = vsel %vm949, %v926, %v691
        %v961 = vsel %vm949, %v928, %v693
        %v963 = vsel %vm949, %v930, %v695
        %v965 = vsel %vm949, %v932, %v697
        %v967 = vsel %vm949, %v934, %v699
        %v969 = vsel %vm949, %v936, %v701
        %v971 = vsel %vm949, %v938, %v703
        %v973 = vsel %vm949, %v940, %v705
        %v975 = vsel %vm949, %v942, %v707
        %v977 = vsel %vm949, %v944, %v709
        %v979 = vsel %vm949, %v946, %v711
        %v981 = vsel %vm949, %v948, %v713
        %vm982 = vcmask 523264
        %v984 = vsel %vm982, %v951, %v730
        %v986 = vsel %vm982, %v953, %v732
        %v988 = vsel %vm982, %v955, %v734
        %v990 = vsel %vm982, %v957, %v736
        %v992 = vsel %vm982, %v959, %v738
        %v994 = vsel %vm982, %v961, %v740
        %v996 = vsel %vm982, %v963, %v742
        %v998 = vsel %vm982, %v965, %v744
        %v1000 = vsel %vm982, %v967, %v746
        %v1002 = vsel %vm982, %v969, %v748
        %v1004 = vsel %vm982, %v971, %v750
        %v1006 = vsel %vm982, %v973, %v752
        %v1008 = vsel %vm982, %v975, %v754
        %v1010 = vsel %vm982, %v977, %v756
        %v1012 = vsel %vm982, %v979, %v758
        %v1014 = vsel %vm982, %v981, %v760
        %vm1015 = vcmask 654336
        %v1017 = vsel %vm1015, %v984, %v765
        %v1019 = vsel %vm1015, %v986, %v767
        %v1021 = vsel %vm1015, %v988, %v769
        %v1023 = vsel %vm1015, %v990, %v771
        %v1025 = vsel %vm1015, %v992, %v773
        %v1027 = vsel %vm1015, %v994, %v775
        %v1029 = vsel %vm1015, %v996, %v777
        %v1031 = vsel %vm1015, %v998, %v779
        %v1033 = vsel %vm1015, %v1000, %v781
        %v1035 = vsel %vm1015, %v1002, %v783
        %v1037 = vsel %vm1015, %v1004, %v785
        %v1039 = vsel %vm1015, %v1006, %v787
        %v1041 = vsel %vm1015, %v1008, %v789
        %v1043 = vsel %vm1015, %v1010, %v791
        %v1045 = vsel %vm1015, %v1012, %v793
        %v1047 = vsel %vm1015, %v1014, %v795
        %vm1048 = vcmask 785408
        %v1050 = vsel %vm1048, %v1017, %v802
        %v1052 = vsel %vm1048, %v1019, %v804
        %v1054 = vsel %vm1048, %v1021, %v806
        %v1056 = vsel %vm1048, %v1023, %v808
        %v1058 = vsel %vm1048, %v1025, %v810
        %v1060 = vsel %vm1048, %v1027, %v812
        %v1062 = vsel %vm1048, %v1029, %v814
        %v1064 = vsel %vm1048, %v1031, %v816
        %v1066 = vsel %vm1048, %v1033, %v818
        %v1068 = vsel %vm1048, %v1035, %v820
        %v1070 = vsel %vm1048, %v1037, %v822
        %v1072 = vsel %vm1048, %v1039, %v824
        %v1074 = vsel %vm1048, %v1041, %v826
        %v1076 = vsel %vm1048, %v1043, %v828
        %v1078 = vsel %vm1048, %v1045, %v830
        %v1080 = vsel %vm1048, %v1047, %v832
        %vm1081 = vcmask 916480
        %v1083 = vsel %vm1081, %v1050, %v849
        %v1086 = vsel %vm1081, %v1052, %v851
        %v1089 = vsel %vm1081, %v1054, %v853
        %v1092 = vsel %vm1081, %v1056, %v855
        %v1095 = vsel %vm1081, %v1058, %v857
        %v1098 = vsel %vm1081, %v1060, %v859
        %v1101 = vsel %vm1081, %v1062, %v861
        %v1104 = vsel %vm1081, %v1064, %v863
        %v1107 = vsel %vm1081, %v1066, %v865
        %v1110 = vsel %vm1081, %v1068, %v867
        %v1113 = vsel %vm1081, %v1070, %v869
        %v1116 = vsel %vm1081, %v1072, %v871
        %v1119 = vsel %vm1081, %v1074, %v873
        %v1122 = vsel %vm1081, %v1076, %v875
        %v1125 = vsel %vm1081, %v1078, %v877
        %v1128 = vsel %vm1081, %v1080, %v879
        %v1130 = vld [vmem:[%s1] sm:$0xf]
        %v1131 = vld [vmem:[%s1 + $0x4] sm:$0xf]
        %v1132 = vld [vmem:[%s1 + $0x8] sm:$0xf]
        %v1133 = vld [vmem:[%s1 + $0xc] sm:$0xf]
        %v1134 = vld [vmem:[%s1 + $0x10] sm:$0xf]
        %v1135 = vld [vmem:[%s1 + $0x14] sm:$0xf]
        %v1136 = vld [vmem:[%s1 + $0x18] sm:$0xf]
        %v1137 = vld [vmem:[%s1 + $0x1c] sm:$0xf]
        %v1138 = vld [vmem:[%s1 + $0x20] sm:$0xf]
        %v1139 = vld [vmem:[%s1 + $0x24] sm:$0xf]
        %v1140 = vld [vmem:[%s1 + $0x28] sm:$0xf]
        %v1141 = vld [vmem:[%s1 + $0x2c] sm:$0xf]
        %v1142 = vld [vmem:[%s1 + $0x30] sm:$0xf]
        %v1143 = vld [vmem:[%s1 + $0x34] sm:$0xf]
        %v1144 = vld [vmem:[%s1 + $0x38] sm:$0xf]
        %v1145 = vld [vmem:[%s1 + $0x3c] sm:$0xf]
        %v1146 = vld [vmem:[%s1 + $0x40] sm:$0xf]
        %v1147 = vld [vmem:[%s1 + $0x44] sm:$0xf]
        %v1148 = vld [vmem:[%s2] sm:$0x1]
        %v1150 = vlaneseq
        %v1151 = vshrl.u32 %v1150, 7
        %v1152 = vsub.s32 0, %v1151
        %v1153 = vrot.slane %v1148, %v1152
        %v1173 = vunpack.c.l.b16 %v1130
        %v1174 = vunpack.c.l.b16 %v1131
        %v1175 = vunpack.c.l.b16 %v1132
        %v1176 = vunpack.c.l.b16 %v1133
        %v1177 = vunpack.c.l.b16 %v1134
        %v1178 = vunpack.c.l.b16 %v1135
        %v1179 = vunpack.c.l.b16 %v1136
        %v1180 = vunpack.c.l.b16 %v1137
        %v1181 = vunpack.c.l.b16 %v1138
        %v1182 = vunpack.c.l.b16 %v1139
        %v1183 = vunpack.c.l.b16 %v1140
        %v1184 = vunpack.c.l.b16 %v1141
        %v1185 = vunpack.c.l.b16 %v1142
        %v1186 = vunpack.c.l.b16 %v1143
        %v1187 = vunpack.c.l.b16 %v1144
        %v1188 = vunpack.c.l.b16 %v1145
        %v1189 = vunpack.c.l.b16 %v1146
        %v1190 = vunpack.c.l.b16 %v1147
        %v1191 = vpack.c.b16 %v1174, %v1173
        %v1192 = vpack.c.b16 %v1176, %v1175
        %v1193 = vpack.c.b16 %v1178, %v1177
        %v1194 = vpack.c.b16 %v1180, %v1179
        %v1195 = vpack.c.b16 %v1182, %v1181
        %v1196 = vpack.c.b16 %v1184, %v1183
        %v1197 = vpack.c.b16 %v1186, %v1185
        %v1198 = vpack.c.b16 %v1188, %v1187
        %v1199 = vpack.c.b16 %v1190, %v1189
        %v1210 = vsel %vm883, %v605, 0
        %v1213 = vsel %vm883, %v608, 0
        %v1216 = vsel %vm883, %v611, 0
        %v1219 = vsel %vm883, %v614, 0
        %v1222 = vsel %vm883, %v617, 0
        %v1225 = vsel %vm883, %v620, 0
        %v1228 = vsel %vm883, %v623, 0
        %v1231 = vsel %vm883, %v626, 0
        %v1234 = vsel %vm883, %v629, 0
        %v1237 = vsel %vm883, %v632, 0
        %v1240 = vsel %vm883, %v635, 0
        %v1243 = vsel %vm883, %v638, 0
        %v1246 = vsel %vm883, %v641, 0
        %v1249 = vsel %vm883, %v644, 0
        %v1252 = vsel %vm883, %v763, 0
        %v1255 = vsel %vm883, %v882, 0
        %1257 = vmatprep.subr.bf16.mxu0 0
        %1258 = vmatpush1.bf16.msra.mxu0 %v1191
        %1259 = vmatprep.subr.bf16.mxu0 0
        %1260 = vmatpush1.bf16.msra.mxu0 %v1192
        %1261 = vmatprep.subr.bf16.mxu0 0
        %1262 = vmatpush1.bf16.msra.mxu0 %v1193
        %1263 = vmatprep.subr.bf16.mxu0 0
        %1264 = vmatpush1.bf16.msra.mxu0 %v1194
        %1265 = vmatprep.subr.bf16.mxu0 0
        %1266 = vmatpush1.bf16.msra.mxu0 %v1195
        %1267 = vmatprep.subr.bf16.mxu0 0
        %1268 = vmatpush1.bf16.msra.mxu0 %v1196
        %1269 = vmatprep.subr.bf16.mxu0 0
        %1270 = vmatpush1.bf16.msra.mxu0 %v1197
        %1271 = vmatprep.subr.bf16.mxu0 0
        %1272 = vmatpush1.bf16.msra.mxu0 %v1198
        %1273 = vmatprep.subr.bf16.mxu0 0
        %1274 = vmatpush1.bf16.msra.mxu0 %v1199
        %1275 = vmatprep.subr.bf16.mxu0 0
        %1276 = vmatpush1.bf16.msra.mxu0 0
        %1277 = vmatprep.subr.bf16.mxu0 0
        %1278 = vmatpush1.bf16.msra.mxu0 0
        %1279 = vmatprep.subr.bf16.mxu0 0
        %1280 = vmatpush1.bf16.msra.mxu0 0
        %1281 = vmatprep.subr.bf16.mxu0 0
        %1282 = vmatpush1.bf16.msra.mxu0 0
        %1283 = vmatprep.subr.bf16.mxu0 0
        %1284 = vmatpush1.bf16.msra.mxu0 0
        %1285 = vmatprep.subr.bf16.mxu0 0
        %1286 = vmatpush1.bf16.msra.mxu0 0
        %1287 = vmatprep.subr.bf16.mxu0 0
        %1288 = vmatpush1.bf16.msra.mxu0 0
        %1289 = vmatprep.mubr.bf16.mxu0 %v1210
        %1290 = vmatmul.mubr.bf16.gmra.mrb[0].mxu0 %v1083
        %v1291 = vpop.f32.mrb[0].mxu0
        %v1292 = vadd.f32 %v1153, %v1291
        %v1293 = vpop.f32.mrb[0].mxu0
        %v1294 = vpop.f32.mrb[0].mxu0
        %v1295 = vadd.f32 %v1153, %v1294
        %v1296 = vpop.f32.mrb[0].mxu0
        %1297 = vmatprep.mubr.bf16.mxu0 %v1213
        %1298 = vmatmul.mubr.bf16.gmra.mrb[0].mxu0 %v1086
        %v1299 = vpop.f32.mrb[0].mxu0
        %v1300 = vadd.f32 %v1153, %v1299
        %v1301 = vpop.f32.mrb[0].mxu0
        %v1302 = vpop.f32.mrb[0].mxu0
        %v1303 = vadd.f32 %v1153, %v1302
        %v1304 = vpop.f32.mrb[0].mxu0
        %1305 = vmatprep.mubr.bf16.mxu0 %v1216
        %1306 = vmatmul.mubr.bf16.gmra.mrb[0].mxu0 %v1089
        %v1307 = vpop.f32.mrb[0].mxu0
        %v1308 = vadd.f32 %v1153, %v1307
        %v1309 = vpop.f32.mrb[0].mxu0
        %v1310 = vpop.f32.mrb[0].mxu0
        %v1311 = vadd.f32 %v1153, %v1310
        %v1312 = vpop.f32.mrb[0].mxu0
        %1313 = vmatprep.mubr.bf16.mxu0 %v1219
        %1314 = vmatmul.mubr.bf16.gmra.mrb[0].mxu0 %v1092
        %v1315 = vpop.f32.mrb[0].mxu0
        %v1316 = vadd.f32 %v1153, %v1315
        %v1317 = vpop.f32.mrb[0].mxu0
        %v1318 = vpop.f32.mrb[0].mxu0
        %v1319 = vadd.f32 %v1153, %v1318
        %v1320 = vpop.f32.mrb[0].mxu0
        %1321 = vmatprep.mubr.bf16.mxu0 %v1222
        %1322 = vmatmul.mubr.bf16.gmra.mrb[0].mxu0 %v1095
        %v1323 = vpop.f32.mrb[0].mxu0
        %v1324 = vadd.f32 %v1153, %v1323
        %v1325 = vpop.f32.mrb[0].mxu0
        %v1326 = vpop.f32.mrb[0].mxu0
        %v1327 = vadd.f32 %v1153, %v1326
        %v1328 = vpop.f32.mrb[0].mxu0
        %1329 = vmatprep.mubr.bf16.mxu0 %v1225
        %1330 = vmatmul.mubr.bf16.gmra.mrb[0].mxu0 %v1098
        %v1331 = vpop.f32.mrb[0].mxu0
        %v1332 = vadd.f32 %v1153, %v1331
        %v1333 = vpop.f32.mrb[0].mxu0
        %v1334 = vpop.f32.mrb[0].mxu0
        %v1335 = vadd.f32 %v1153, %v1334
        %v1336 = vpop.f32.mrb[0].mxu0
        %1337 = vmatprep.mubr.bf16.mxu0 %v1228
        %1338 = vmatmul.mubr.bf16.gmra.mrb[0].mxu0 %v1101
        %v1339 = vpop.f32.mrb[0].mxu0
        %v1340 = vadd.f32 %v1153, %v1339
        %v1341 = vpop.f32.mrb[0].mxu0
        %v1342 = vpop.f32.mrb[0].mxu0
        %v1343 = vadd.f32 %v1153, %v1342
        %v1344 = vpop.f32.mrb[0].mxu0
        %1345 = vmatprep.mubr.bf16.mxu0 %v1231
        %1346 = vmatmul.mubr.bf16.gmra.mrb[0].mxu0 %v1104
        %v1347 = vpop.f32.mrb[0].mxu0
        %v1348 = vadd.f32 %v1153, %v1347
        %v1349 = vpop.f32.mrb[0].mxu0
        %v1350 = vpop.f32.mrb[0].mxu0
        %v1351 = vadd.f32 %v1153, %v1350
        %v1352 = vpop.f32.mrb[0].mxu0
        %1353 = vmatprep.mubr.bf16.mxu0 %v1234
        %1354 = vmatmul.mubr.bf16.gmra.mrb[0].mxu0 %v1107
        %v1355 = vpop.f32.mrb[0].mxu0
        %v1356 = vadd.f32 %v1153, %v1355
        %v1357 = vpop.f32.mrb[0].mxu0
        %v1358 = vpop.f32.mrb[0].mxu0
        %v1359 = vadd.f32 %v1153, %v1358
        %v1360 = vpop.f32.mrb[0].mxu0
        %1361 = vmatprep.mubr.bf16.mxu0 %v1237
        %1362 = vmatmul.mubr.bf16.gmra.mrb[0].mxu0 %v1110
        %v1363 = vpop.f32.mrb[0].mxu0
        %v1364 = vadd.f32 %v1153, %v1363
        %v1365 = vpop.f32.mrb[0].mxu0
        %v1366 = vpop.f32.mrb[0].mxu0
        %v1367 = vadd.f32 %v1153, %v1366
        %v1368 = vpop.f32.mrb[0].mxu0
        %1369 = vmatprep.mubr.bf16.mxu0 %v1240
        %1370 = vmatmul.mubr.bf16.gmra.mrb[0].mxu0 %v1113
        %v1371 = vpop.f32.mrb[0].mxu0
        %v1372 = vadd.f32 %v1153, %v1371
        %v1373 = vpop.f32.mrb[0].mxu0
        %v1374 = vpop.f32.mrb[0].mxu0
        %v1375 = vadd.f32 %v1153, %v1374
        %v1376 = vpop.f32.mrb[0].mxu0
        %1377 = vmatprep.mubr.bf16.mxu0 %v1243
        %1378 = vmatmul.mubr.bf16.gmra.mrb[0].mxu0 %v1116
        %v1379 = vpop.f32.mrb[0].mxu0
        %v1380 = vadd.f32 %v1153, %v1379
        %v1381 = vpop.f32.mrb[0].mxu0
        %v1382 = vpop.f32.mrb[0].mxu0
        %v1383 = vadd.f32 %v1153, %v1382
        %v1384 = vpop.f32.mrb[0].mxu0
        %1385 = vmatprep.mubr.bf16.mxu0 %v1246
        %1386 = vmatmul.mubr.bf16.gmra.mrb[0].mxu0 %v1119
        %v1387 = vpop.f32.mrb[0].mxu0
        %v1388 = vadd.f32 %v1153, %v1387
        %v1389 = vpop.f32.mrb[0].mxu0
        %v1390 = vpop.f32.mrb[0].mxu0
        %v1391 = vadd.f32 %v1153, %v1390
        %v1392 = vpop.f32.mrb[0].mxu0
        %1393 = vmatprep.mubr.bf16.mxu0 %v1249
        %1394 = vmatmul.mubr.bf16.gmra.mrb[0].mxu0 %v1122
        %v1395 = vpop.f32.mrb[0].mxu0
        %v1396 = vadd.f32 %v1153, %v1395
        %v1397 = vpop.f32.mrb[0].mxu0
        %v1398 = vpop.f32.mrb[0].mxu0
        %v1399 = vadd.f32 %v1153, %v1398
        %v1400 = vpop.f32.mrb[0].mxu0
        %1401 = vmatprep.mubr.bf16.mxu0 %v1252
        %1402 = vmatmul.mubr.bf16.gmra.mrb[0].mxu0 %v1125
        %v1403 = vpop.f32.mrb[0].mxu0
        %v1404 = vadd.f32 %v1153, %v1403
        %v1405 = vpop.f32.mrb[0].mxu0
        %v1406 = vpop.f32.mrb[0].mxu0
        %v1407 = vadd.f32 %v1153, %v1406
        %v1408 = vpop.f32.mrb[0].mxu0
        %1409 = vmatprep.mubr.bf16.mxu0 %v1255
        %1410 = vmatmul.mubr.bf16.gmra.mrb[0].mxu0 %v1128
        %v1411 = vpop.f32.mrb[0].mxu0
        %v1412 = vadd.f32 %v1153, %v1411
        %v1413 = vpop.f32.mrb[0].mxu0
        %v1414 = vpop.f32.mrb[0].mxu0
        %v1415 = vadd.f32 %v1153, %v1414
        %v1416 = vpop.f32.mrb[0].mxu0
        %1417 = vdwg.mxu0
        %v1418 = vmax.f32 %v1292, 0.0
        %v1419 = vmax.f32 %v1295, 0.0
        %v1420 = vmax.f32 %v1300, 0.0
        %v1421 = vmax.f32 %v1303, 0.0
        %v1422 = vmax.f32 %v1308, 0.0
        %v1423 = vmax.f32 %v1311, 0.0
        %v1424 = vmax.f32 %v1316, 0.0
        %v1425 = vmax.f32 %v1319, 0.0
        %v1426 = vmax.f32 %v1324, 0.0
        %v1427 = vmax.f32 %v1327, 0.0
        %v1428 = vmax.f32 %v1332, 0.0
        %v1429 = vmax.f32 %v1335, 0.0
        %v1430 = vmax.f32 %v1340, 0.0
        %v1431 = vmax.f32 %v1343, 0.0
        %v1432 = vmax.f32 %v1348, 0.0
        %v1433 = vmax.f32 %v1351, 0.0
        %v1434 = vmax.f32 %v1356, 0.0
        %v1435 = vmax.f32 %v1359, 0.0
        %v1436 = vmax.f32 %v1364, 0.0
        %v1437 = vmax.f32 %v1367, 0.0
        %v1438 = vmax.f32 %v1372, 0.0
        %v1439 = vmax.f32 %v1375, 0.0
        %v1440 = vmax.f32 %v1380, 0.0
        %v1441 = vmax.f32 %v1383, 0.0
        %v1442 = vmax.f32 %v1388, 0.0
        %v1443 = vmax.f32 %v1391, 0.0
        %v1444 = vmax.f32 %v1396, 0.0
        %v1445 = vmax.f32 %v1399, 0.0
        %v1446 = vmax.f32 %v1404, 0.0
        %v1447 = vmax.f32 %v1407, 0.0
        %v1448 = vmax.f32 %v1412, 0.0
        %v1449 = vmax.f32 %v1415, 0.0
        %1450 = vst [vmem:[%s177] sm:$0xff] %v1418
        %1451 = vst [vmem:[%s177 + $0x8] sm:$0xff] %v1419
        %1452 = vst [vmem:[%s177 + $0x10] sm:$0xff] %v1420
        %1453 = vst [vmem:[%s177 + $0x18] sm:$0xff] %v1421
        %1454 = vst [vmem:[%s177 + $0x20] sm:$0xff] %v1422
        %1455 = vst [vmem:[%s177 + $0x28] sm:$0xff] %v1423
        %1456 = vst [vmem:[%s177 + $0x30] sm:$0xff] %v1424
        %1457 = vst [vmem:[%s177 + $0x38] sm:$0xff] %v1425
        %1458 = vst [vmem:[%s177 + $0x40] sm:$0xff] %v1426
        %1459 = vst [vmem:[%s177 + $0x48] sm:$0xff] %v1427
        %1460 = vst [vmem:[%s177 + $0x50] sm:$0xff] %v1428
        %1461 = vst [vmem:[%s177 + $0x58] sm:$0xff] %v1429
        %1462 = vst [vmem:[%s177 + $0x60] sm:$0xff] %v1430
        %1463 = vst [vmem:[%s177 + $0x68] sm:$0xff] %v1431
        %1464 = vst [vmem:[%s177 + $0x70] sm:$0xff] %v1432
        %1465 = vst [vmem:[%s177 + $0x78] sm:$0xff] %v1433
        %1466 = vst [vmem:[%s177 + $0x80] sm:$0xff] %v1434
        %1467 = vst [vmem:[%s177 + $0x88] sm:$0xff] %v1435
        %1468 = vst [vmem:[%s177 + $0x90] sm:$0xff] %v1436
        %1469 = vst [vmem:[%s177 + $0x98] sm:$0xff] %v1437
        %1470 = vst [vmem:[%s177 + $0xa0] sm:$0xff] %v1438
        %1471 = vst [vmem:[%s177 + $0xa8] sm:$0xff] %v1439
        %1472 = vst [vmem:[%s177 + $0xb0] sm:$0xff] %v1440
        %1473 = vst [vmem:[%s177 + $0xb8] sm:$0xff] %v1441
        %1474 = vst [vmem:[%s177 + $0xc0] sm:$0xff] %v1442
        %1475 = vst [vmem:[%s177 + $0xc8] sm:$0xff] %v1443
        %1476 = vst [vmem:[%s177 + $0xd0] sm:$0xff] %v1444
        %1477 = vst [vmem:[%s177 + $0xd8] sm:$0xff] %v1445
        %1478 = vst [vmem:[%s177 + $0xe0] sm:$0xff] %v1446
        %1479 = vst [vmem:[%s177 + $0xe8] sm:$0xff] %v1447
        %1480 = vst [vmem:[%s177 + $0xf0] sm:$0xff] %v1448
        %1481 = vst [vmem:[%s177 + $0xf8] sm:$0xff] %v1449
        %s1482 = sand.u32 %s107, 1
        %s1483 = scalar_lea.sflag [#allocation3], %s1482
        %s1484 = sand.u32 %s107, 1
        %s1485 = smul.addr %s1484, 256
        %s1486 = scalar_lea.vmem [#allocation2], %s1485
        // Predicated region
        $region33: #{tpu_custom_call.1} parent=31 // pred_check
          %p1487 = pneg %p117
        $region34: #{tpu_custom_call.1} parent=31 // pred_check_branch
          %1489 = sbr.rel (%p1487) target = $region36
        $region35: #{tpu_custom_call.1} parent=31 // pred_region
          %s1490 = smul.u32 32, %s22
          %s1492 = ssub.s32 4096, 4096
          %1493 = vsyncadd %s1483, %s1492
          %s1494 = smul.addr %s21, 32
          %s1495 = sadd.s32 %s1490, %s1494
          %s1496 = smul.addr %s1495, 128
          %s1497 = scalar_lea.hbm %s3, %s1496
          %s1498 = sshll.u32 %s1486, 4
          %s1499 = int_to_ptr.vmem [resolvable:$true] %s1498
          %1504 = dma.vmem_to_hbm [thread:$0]  %s1499, 4096, %s1497, %s1483, 128, 128, 8
        $region36: #{tpu_custom_call.1} parent=31 // pred_fallthru
          _
      $region32: #{tpu_custom_call.1} parent=5 // pred_fallthru
        _
      %p1505 = scmp.le.s32.totalorder 2, %s12
      // Predicated region
      $region37: #{tpu_custom_call.1} parent=5 // pred_check
        %p1506 = pneg %p1505
      $region38: #{tpu_custom_call.1} parent=5 // pred_check_branch
        %1508 = sbr.rel (%p1506) target = $region40
      $region39: #{tpu_custom_call.1} parent=5 // pred_region
        %s1509 = ssub.s32 %s12, 2
        // Predicated region
        $region41: #{tpu_custom_call.1} parent=39 // pred_check
          %p1510 = pneg %p123
        $region42: #{tpu_custom_call.1} parent=39 // pred_check_branch
          %1512 = sbr.rel (%p1510) target = $region44
        $region43: #{tpu_custom_call.1} parent=39 // pred_region
          %s1513 = sand.u32 %s108, 1
          %s1514 = scalar_lea.sflag [#allocation3], %s1513
          %s1515 = sand.u32 %s108, 1
          %s1516 = smul.addr %s1515, 256
          %s1517 = scalar_lea.vmem [#allocation2], %s1516
          %1518 = dma.done %s1514, 4096
        $region44: #{tpu_custom_call.1} parent=39 // pred_fallthru
          _
      $region40: #{tpu_custom_call.1} parent=5 // pred_fallthru
        _
    $region6: #{tpu_custom_call.1} parent=1 // loop_footer
      %s16 = sadd.s32 1, %s12
    $region7: #{tpu_custom_call.1} parent=1 // loop_footer_branch
      %11 = sbr.rel target = $region3
    $region8: #{tpu_custom_call.1} parent=1 // loop_exit
      _
    %1519 = vsyncpa [#allocation3], 1
    %s1520 = scalar_lea.sflag [#allocation3], 1
    %1521 = vsyncpa %s1520, 1

</llo_original>
